<compile_context>
chip_gen: v7x
topology: tpu7x:2x2x1
jax: 0.10.0
libtpu: 0.0.40
codegen_flags: <defaults>
</compile_context>

<pallas_src>
import jax
import jax.numpy as jnp
from jax.experimental import pallas as pl
from jax.experimental.pallas import tpu as pltpu

# ---- module hyper-params (wandb.config.NUM_OF_LINKS chosen small) ----------
HIDDEN_SIZE = 8
NUM_OF_LINKS = 4                   # synthetic config value
N_ACTIONS = NUM_OF_LINKS           # 4
N_STATES = NUM_OF_LINKS * 2        # 8
WI = 2.0 / HIDDEN_SIZE             # std for weight init (0.25)

MAX_TILE = 8192                    # batch rows per grid step (gridded path)
NO_GRID_MAX = 1024                 # <= this: single-shot whole-VMEM Pallas
XLA_SMALL_DEFAULT = 2048           # <= this: prefer one fused XLA expression


def _round_up(n, m):
    return ((n + m - 1) // m) * m


def actor_kernel(x_ref, w1t_ref, b1_ref, w2t_ref, b2_ref, o_ref):
    """Fused forward on one batch tile (natural row-major orientation).

    x_ref  : (T, N_STATES)
    w1t_ref: (N_STATES, HIDDEN_SIZE)   = W1.T
    b1_ref : (1, HIDDEN_SIZE)
    w2t_ref: (HIDDEN_SIZE, N_ACTIONS)  = W2.T
    b2_ref : (1, N_ACTIONS)
    o_ref  : (T, N_ACTIONS)
    """
    h = jnp.dot(x_ref[...], w1t_ref[...],
                preferred_element_type=jnp.float32) + b1_ref[...]
    h = jnp.maximum(h, 0.0)                               # ReLU on the VPU
    y = jnp.dot(h, w2t_ref[...],
                preferred_element_type=jnp.float32) + b2_ref[...]
    o_ref[...] = y.astype(o_ref.dtype)


def prepare_params(w1, b1, w2, b2):
    """Hoisted once per parameter set (weights are static across forwards)."""
    return (jnp.asarray(w1, jnp.float32).T,           # (N_STATES, H)
            jnp.asarray(b1, jnp.float32).reshape(1, -1),
            jnp.asarray(w2, jnp.float32).T,           # (H, N_ACTIONS)
            jnp.asarray(b2, jnp.float32).reshape(1, -1))


def actor_no_gs_forward(x, params, *, xla_small_batch_threshold=XLA_SMALL_DEFAULT):
    """x: (B, N_STATES) float32 -> (B, N_ACTIONS). Matches Actor_no_gs.forward."""
    B = x.shape[0]
    w1t, b1r, w2t, b2r = params
    x = x.astype(jnp.float32)

    # Tiny batches: one fused XLA expression beats any pallas_call fixed cost.
    if B <= xla_small_batch_threshold:
        return jnp.maximum(x @ w1t + b1r, 0.0) @ w2t + b2r

    if B <= NO_GRID_MAX:
        # Single shot: whole arrays in VMEM, no grid / pipelining bookkeeping.
        B_pad = max(8, _round_up(B, 8))
        x_in = x if B_pad == B else jnp.pad(x, ((0, B_pad - B), (0, 0)))
        y = pl.pallas_call(
            actor_kernel,
            out_shape=jax.ShapeDtypeStruct((B_pad, N_ACTIONS), jnp.float32),
            in_specs=[pl.BlockSpec(memory_space=pltpu.MemorySpace.VMEM)] * 5,
            out_specs=pl.BlockSpec(memory_space=pltpu.MemorySpace.VMEM),
        )(x_in, w1t, b1r, w2t, b2r)
        return y[:B]

    # Gridded path: 1-D parallel grid over batch-row tiles.  Tile is capped at
    # MAX_TILE but also at ~B/2 so there are always >= 2 grid steps (keeps both
    # v7x TensorCores busy).  B is not padded; the last block is masked.
    tile = min(MAX_TILE, _round_up(-(-B // 2), 8))
    grid = (pl.cdiv(B, tile),)

    flops = 2 * B * (N_STATES * HIDDEN_SIZE + HIDDEN_SIZE * N_ACTIONS)
    bytes_accessed = 4 * (B * (N_STATES + N_ACTIONS)
                          + N_STATES * HIDDEN_SIZE + HIDDEN_SIZE
                          + HIDDEN_SIZE * N_ACTIONS + N_ACTIONS)

    return pl.pallas_call(
        actor_kernel,
        out_shape=jax.ShapeDtypeStruct((B, N_ACTIONS), jnp.float32),
        grid=grid,
        in_specs=[
            pl.BlockSpec((tile, N_STATES), lambda i: (i, 0)),
            # Weights / biases stay VMEM-resident via constant index maps.
            pl.BlockSpec((N_STATES, HIDDEN_SIZE), lambda i: (0, 0)),
            pl.BlockSpec((1, HIDDEN_SIZE), lambda i: (0, 0)),
            pl.BlockSpec((HIDDEN_SIZE, N_ACTIONS), lambda i: (0, 0)),
            pl.BlockSpec((1, N_ACTIONS), lambda i: (0, 0)),
        ],
        out_specs=pl.BlockSpec((tile, N_ACTIONS), lambda i: (i, 0)),
        compiler_params=pltpu.CompilerParams(
            dimension_semantics=("parallel",),
            vmem_limit_bytes=40 * 1024 * 1024),
        cost_estimate=pl.CostEstimate(
            flops=flops, transcendentals=0, bytes_accessed=bytes_accessed),
    )(x, w1t, b1r, w2t, b2r)


def init_params(key):
    """Matches the PyTorch module's __init__ semantics:
    weights ~ Normal(0, wi) in (out_features, in_features) layout;
    biases keep nn.Linear's default U(-1/sqrt(fan_in), 1/sqrt(fan_in))."""
    k1, k2, k3, k4 = jax.random.split(key, 4)
    w1 = WI * jax.random.normal(k1, (HIDDEN_SIZE, N_STATES), jnp.float32)
    b1 = jax.random.uniform(
        k2, (HIDDEN_SIZE,), jnp.float32,
        minval=-1.0 / jnp.sqrt(N_STATES), maxval=1.0 / jnp.sqrt(N_STATES))
    w2 = WI * jax.random.normal(k3, (N_ACTIONS, HIDDEN_SIZE), jnp.float32)
    b2 = jax.random.uniform(
        k4, (N_ACTIONS,), jnp.float32,
        minval=-1.0 / jnp.sqrt(HIDDEN_SIZE), maxval=1.0 / jnp.sqrt(HIDDEN_SIZE))
    return w1, b1, w2, b2


def _reference(x, w1, b1, w2, b2):
    return jnp.maximum(x @ w1.T + b1, 0.0) @ w2.T + b2


if __name__ == "__main__":
    key = jax.random.PRNGKey(0)
    k_params, k_small, k_big = jax.random.split(key, 3)
    w1, b1, w2, b2 = init_params(k_params)
    params = prepare_params(w1, b1, w2, b2)   # hoisted: done once, not per call

    # 1) Small batch, forced through the no-grid Pallas path.
    B_small = 2
    x_small = jax.random.normal(k_small, (B_small, N_STATES), jnp.float32)
    out_small = jax.block_until_ready(
        actor_no_gs_forward(x_small, params, xla_small_batch_threshold=0))
    ref_small = _reference(x_small, w1, b1, w2, b2)
    assert out_small.shape == (B_small, N_ACTIONS)
    assert jnp.allclose(out_small, ref_small, atol=1e-5, rtol=1e-5)

    # 2) Same small batch through the default path (fused-XLA small-batch
    #    fallback recommended by the perf review for RL-style inference).
    out_small_xla = jax.block_until_ready(actor_no_gs_forward(x_small, params))
    assert jnp.allclose(out_small_xla, ref_small, atol=1e-5, rtol=1e-5)

    # 3) Larger batch through the gridded Pallas path (tile=8192 -> 3 grid
    #    steps incl. a partial last block), jitted as in a training loop.
    B_big = 20000
    x_big = jax.random.normal(k_big, (B_big, N_STATES), jnp.float32)
    fwd_big = jax.jit(lambda xx: actor_no_gs_forward(xx, params))
    out_big = jax.block_until_ready(fwd_big(x_big))
    ref_big = _reference(x_big, w1, b1, w2, b2)
    assert out_big.shape == (B_big, N_ACTIONS)
    assert jnp.allclose(out_big, ref_big, atol=1e-4, rtol=1e-4)

    print("KERNEL_OK")
</pallas_src>

<mosaic_0001>
module attributes {stable_mosaic.version = 11 : i64} {
  func.func @actor_kernel(%arg0: memref<8x8xf32, #tpu.memory_space<vmem>>, %arg1: memref<8x8xf32, #tpu.memory_space<vmem>>, %arg2: memref<1x8xf32, #tpu.memory_space<vmem>>, %arg3: memref<8x4xf32, #tpu.memory_space<vmem>>, %arg4: memref<1x4xf32, #tpu.memory_space<vmem>>, %arg5: memref<8x4xf32, #tpu.memory_space<vmem>>) attributes {dimension_semantics = [], scalar_prefetch = 0 : i64, scratch_operands = 0 : i64, tpu.core_type = #tpu.core_type<tc>} {
    %c0 = arith.constant 0 : index
    %c0_0 = arith.constant 0 : index
    %0 = vector.load %arg0[%c0, %c0_0] : memref<8x8xf32, #tpu.memory_space<vmem>>, vector<8x8xf32>
    %c0_1 = arith.constant 0 : index
    %c0_2 = arith.constant 0 : index
    %1 = vector.load %arg1[%c0_1, %c0_2] : memref<8x8xf32, #tpu.memory_space<vmem>>, vector<8x8xf32>
    %cst = arith.constant dense<0.000000e+00> : vector<8x8xf32>
    %2 = tpu.matmul %0, %1, %cst {dimension_numbers = #tpu.dot_dimension_numbers<[1], [0], [0], [1], [0, 0, 1, 1], [], []>} : vector<8x8xf32>, vector<8x8xf32>, vector<8x8xf32> -> vector<8x8xf32>
    %c0_3 = arith.constant 0 : index
    %c0_4 = arith.constant 0 : index
    %3 = vector.load %arg2[%c0_3, %c0_4] : memref<1x8xf32, #tpu.memory_space<vmem>>, vector<1x8xf32>
    %4 = vector.broadcast %3 : vector<1x8xf32> to vector<8x8xf32>
    %5 = arith.addf %2, %4 : vector<8x8xf32>
    %cst_5 = arith.constant 0.000000e+00 : f32
    %6 = vector.broadcast %cst_5 : f32 to vector<8x8xf32>
    %7 = arith.maximumf %5, %6 : vector<8x8xf32>
    %c0_6 = arith.constant 0 : index
    %c0_7 = arith.constant 0 : index
    %8 = vector.load %arg3[%c0_6, %c0_7] : memref<8x4xf32, #tpu.memory_space<vmem>>, vector<8x4xf32>
    %cst_8 = arith.constant dense<0.000000e+00> : vector<8x4xf32>
    %9 = tpu.matmul %7, %8, %cst_8 {dimension_numbers = #tpu.dot_dimension_numbers<[1], [0], [0], [1], [0, 0, 1, 1], [], []>} : vector<8x8xf32>, vector<8x4xf32>, vector<8x4xf32> -> vector<8x4xf32>
    %c0_9 = arith.constant 0 : index
    %c0_10 = arith.constant 0 : index
    %10 = vector.load %arg4[%c0_9, %c0_10] : memref<1x4xf32, #tpu.memory_space<vmem>>, vector<1x4xf32>
    %11 = vector.broadcast %10 : vector<1x4xf32> to vector<8x4xf32>
    %12 = arith.addf %9, %11 : vector<8x4xf32>
    %c0_11 = arith.constant 0 : index
    %c0_12 = arith.constant 0 : index
    %13 = vector.load %arg5[%c0_11, %c0_12] : memref<8x4xf32, #tpu.memory_space<vmem>>, vector<8x4xf32>
    tpu.vector_store %arg5[%c0_11, %c0_12], %12 {strides = array<i32>} : memref<8x4xf32, #tpu.memory_space<vmem>>, vector<8x4xf32>,
    return
  }
}

</mosaic_0001>

<llo_original>
// kernel: tpu_custom_call.1
$region0: #{tpu_custom_call.1}
  #allocation0 [shape = 'u32[]', space=smem, size = 0x4, offset = 0x4, fixed_abs, tag = 'smem constant byte address 0x4 - core index']
  #allocation1 [shape = 'u32[144,128]{1,0:T(1,128)}', space=vmem, size = 0x12000, scoped, tag = 'internal scratch']
  %s0 = inlined_call_operand.vmem [shape: f32[8,8], index: 0, kind: input, shape index: {}]
  %s1 = inlined_call_operand.hbm [shape: f32[8,8], index: 1, kind: input, shape index: {}]
  %s2 = inlined_call_operand.vmem [shape: f32[1,8], index: 2, kind: input, shape index: {}]
  %s3 = inlined_call_operand.vmem [shape: f32[8,4], index: 3, kind: input, shape index: {}]
  %s4 = inlined_call_operand.vmem [shape: f32[1,4], index: 4, kind: input, shape index: {}]
  %s5 = inlined_call_operand.vmem [shape: f32[8,4], index: 5, kind: output, shape index: {}]
  %s6 = sld [smem:[#allocation0]]
  $region34: #{tpu_custom_call.1} parent=0
    _
  %s8 = ssub.s32 1, %s6
  %s9 = scalar_select 0, %s8, %s6
  $region1: #{tpu_custom_call.1} parent=0
    #allocation2 [shape = 'u8[4096]{0}', space=vmem, size = 0x1000, scoped, tag = 'input window, operand 1, single buffered']
    #allocation3 [shape = 's32[1]{0}', space=sflag, size = 0x4, scoped, tag = 'scoped memory for tpu_custom_call.1']
    %10 = vsyncpa [#allocation3], 0
    // Predicated region
    $region2: #{tpu_custom_call.1} parent=1 // pred_check
      _
    $region3: #{tpu_custom_call.1} parent=1 // pred_check_branch
      %12 = sbr.rel (0) target = $region5
    $region4: #{tpu_custom_call.1} parent=1 // pred_region
      _
    $region5: #{tpu_custom_call.1} parent=1 // pred_fallthru
      _
    // Predicated region
    $region6: #{tpu_custom_call.1} parent=1 // pred_check
      _
    $region7: #{tpu_custom_call.1} parent=1 // pred_check_branch
      %14 = sbr.rel (0) target = $region9
    $region8: #{tpu_custom_call.1} parent=1 // pred_region
      %s16 = ssub.s32 128, 128
      %17 = vsyncadd [#allocation3], %s16
      %s19 = sshll.u32 [#allocation2], 4
      %s20 = int_to_ptr.vmem [resolvable:$true] %s19
      %22 = dma.hbm_to_vmem [thread:$0]  %s1, 128, %s20, [#allocation3]
    $region9: #{tpu_custom_call.1} parent=1 // pred_fallthru
      _
    // Predicated region
    $region10: #{tpu_custom_call.1} parent=1 // pred_check
      _
    $region11: #{tpu_custom_call.1} parent=1 // pred_check_branch
      %24 = sbr.rel (0) target = $region13
    $region12: #{tpu_custom_call.1} parent=1 // pred_region
      _
    $region13: #{tpu_custom_call.1} parent=1 // pred_fallthru
      _
    // Predicated region
    $region14: #{tpu_custom_call.1} parent=1 // pred_check
      _
    $region15: #{tpu_custom_call.1} parent=1 // pred_check_branch
      %26 = sbr.rel (0) target = $region17
    $region16: #{tpu_custom_call.1} parent=1 // pred_region
      _
    $region17: #{tpu_custom_call.1} parent=1 // pred_fallthru
      _
    // Predicated region
    $region18: #{tpu_custom_call.1} parent=1 // pred_check
      _
    $region19: #{tpu_custom_call.1} parent=1 // pred_check_branch
      %28 = sbr.rel (0) target = $region21
    $region20: #{tpu_custom_call.1} parent=1 // pred_region
      _
    $region21: #{tpu_custom_call.1} parent=1 // pred_fallthru
      _
    // Predicated region
    $region22: #{tpu_custom_call.1} parent=1 // pred_check
      _
    $region23: #{tpu_custom_call.1} parent=1 // pred_check_branch
      %30 = sbr.rel (0) target = $region25
    $region24: #{tpu_custom_call.1} parent=1 // pred_region
      %31 = dma.done [#allocation3], 128
    $region25: #{tpu_custom_call.1} parent=1 // pred_fallthru
      _
    %v32 = vld [vmem:[%s0] sm:$0xff]
    %v33 = vld [vmem:[#allocation2] sm:$0xff]
    %v34 = vld [vmem:[%s2] sm:$0x1]
    %v36 = vlaneseq
    %v37 = vshrl.u32 %v36, 7
    %v38 = vsub.s32 0, %v37
    %v39 = vrot.slane %v34, %v38
    %vm41 = vcmask 64512
    %v43 = vsel %vm41, %v32, 0
    %45 = vmatprep.subr.mxu0 0.0
    %46 = vmatpush1.msra.mxu0 %v33
    %47 = vmatprep.subr.mxu0 0.0
    %48 = vmatpush1.msra.mxu0 0.0
    %49 = vmatprep.subr.mxu0 0.0
    %50 = vmatpush1.msra.mxu0 0.0
    %51 = vmatprep.subr.mxu0 0.0
    %52 = vmatpush1.msra.mxu0 0.0
    %53 = vmatprep.subr.mxu0 0.0
    %54 = vmatpush1.msra.mxu0 0.0
    %55 = vmatprep.subr.mxu0 0.0
    %56 = vmatpush1.msra.mxu0 0.0
    %57 = vmatprep.subr.mxu0 0.0
    %58 = vmatpush1.msra.mxu0 0.0
    %59 = vmatprep.subr.mxu0 0.0
    %60 = vmatpush1.msra.mxu0 0.0
    %61 = vmatprep.subr.mxu0 0.0
    %62 = vmatpush1.msra.mxu0 0.0
    %63 = vmatprep.subr.mxu0 0.0
    %64 = vmatpush1.msra.mxu0 0.0
    %65 = vmatprep.subr.mxu0 0.0
    %66 = vmatpush1.msra.mxu0 0.0
    %67 = vmatprep.subr.mxu0 0.0
    %68 = vmatpush1.msra.mxu0 0.0
    %69 = vmatprep.subr.mxu0 0.0
    %70 = vmatpush1.msra.mxu0 0.0
    %71 = vmatprep.subr.mxu0 0.0
    %72 = vmatpush1.msra.mxu0 0.0
    %73 = vmatprep.subr.mxu0 0.0
    %74 = vmatpush1.msra.mxu0 0.0
    %75 = vmatprep.subr.mxu0 0.0
    %76 = vmatpush1.msra.mxu0 0.0
    %77 = vmatprep.subr.mxu0 0.0
    %78 = vmatpush1.msra.mxu0 0.0
    %79 = vmatprep.subr.mxu0 0.0
    %80 = vmatpush1.msra.mxu0 0.0
    %81 = vmatprep.subr.mxu0 0.0
    %82 = vmatpush1.msra.mxu0 0.0
    %83 = vmatprep.subr.mxu0 0.0
    %84 = vmatpush1.msra.mxu0 0.0
    %85 = vmatprep.subr.mxu0 0.0
    %86 = vmatpush1.msra.mxu0 0.0
    %87 = vmatprep.subr.mxu0 0.0
    %88 = vmatpush1.msra.mxu0 0.0
    %89 = vmatprep.subr.mxu0 0.0
    %90 = vmatpush1.msra.mxu0 0.0
    %91 = vmatprep.subr.mxu0 0.0
    %92 = vmatpush1.msra.mxu0 0.0
    %93 = vmatprep.subr.mxu0 0.0
    %94 = vmatpush1.msra.mxu0 0.0
    %95 = vmatprep.subr.mxu0 0.0
    %96 = vmatpush1.msra.mxu0 0.0
    %97 = vmatprep.subr.mxu0 0.0
    %98 = vmatpush1.msra.mxu0 0.0
    %99 = vmatprep.subr.mxu0 0.0
    %100 = vmatpush1.msra.mxu0 0.0
    %101 = vmatprep.subr.mxu0 0.0
    %102 = vmatpush1.msra.mxu0 0.0
    %103 = vmatprep.subr.mxu0 0.0
    %104 = vmatpush1.msra.mxu0 0.0
    %105 = vmatprep.subr.mxu0 0.0
    %106 = vmatpush1.msra.mxu0 0.0
    %107 = vmatprep.subr.mxu0 0.0
    %108 = vmatpush1.msra.mxu0 0.0
    %109 = vmatprep.mubr.f32.mxu0 0.0
    %110 = vmatmul.mubr.f32.gmra.mrb[0].mxu0 %v43
    %v111 = vpop.f32.mrb[0].mxu0
    %v112 = vadd.f32 %v39, %v111
    %v113 = vpop.f32.mrb[0].mxu0
    %114 = vdwg.mxu0
    %v115 = vmax.f32 %v112, 0.0
    %v116 = vld [vmem:[%s3] sm:$0xff]
    %v117 = vld [vmem:[%s4] sm:$0x1]
    %v119 = vlaneseq
    %v120 = vshrl.u32 %v119, 7
    %v121 = vsub.s32 0, %v120
    %v122 = vrot.slane %v117, %v121
    %v125 = vsel %vm41, %v115, 0
    %127 = vmatprep.subr.mxu0 0.0
    %128 = vmatpush1.msra.mxu0 %v116
    %129 = vmatprep.subr.mxu0 0.0
    %130 = vmatpush1.msra.mxu0 0.0
    %131 = vmatprep.subr.mxu0 0.0
    %132 = vmatpush1.msra.mxu0 0.0
    %133 = vmatprep.subr.mxu0 0.0
    %134 = vmatpush1.msra.mxu0 0.0
    %135 = vmatprep.subr.mxu0 0.0
    %136 = vmatpush1.msra.mxu0 0.0
    %137 = vmatprep.subr.mxu0 0.0
    %138 = vmatpush1.msra.mxu0 0.0
    %139 = vmatprep.subr.mxu0 0.0
    %140 = vmatpush1.msra.mxu0 0.0
    %141 = vmatprep.subr.mxu0 0.0
    %142 = vmatpush1.msra.mxu0 0.0
    %143 = vmatprep.subr.mxu0 0.0
    %144 = vmatpush1.msra.mxu0 0.0
    %145 = vmatprep.subr.mxu0 0.0
    %146 = vmatpush1.msra.mxu0 0.0
    %147 = vmatprep.subr.mxu0 0.0
    %148 = vmatpush1.msra.mxu0 0.0
    %149 = vmatprep.subr.mxu0 0.0
    %150 = vmatpush1.msra.mxu0 0.0
    %151 = vmatprep.subr.mxu0 0.0
    %152 = vmatpush1.msra.mxu0 0.0
    %153 = vmatprep.subr.mxu0 0.0
    %154 = vmatpush1.msra.mxu0 0.0
    %155 = vmatprep.subr.mxu0 0.0
    %156 = vmatpush1.msra.mxu0 0.0
    %157 = vmatprep.subr.mxu0 0.0
    %158 = vmatpush1.msra.mxu0 0.0
    %159 = vmatprep.subr.mxu0 0.0
    %160 = vmatpush1.msra.mxu0 0.0
    %161 = vmatprep.subr.mxu0 0.0
    %162 = vmatpush1.msra.mxu0 0.0
    %163 = vmatprep.subr.mxu0 0.0
    %164 = vmatpush1.msra.mxu0 0.0
    %165 = vmatprep.subr.mxu0 0.0
    %166 = vmatpush1.msra.mxu0 0.0
    %167 = vmatprep.subr.mxu0 0.0
    %168 = vmatpush1.msra.mxu0 0.0
    %169 = vmatprep.subr.mxu0 0.0
    %170 = vmatpush1.msra.mxu0 0.0
    %171 = vmatprep.subr.mxu0 0.0
    %172 = vmatpush1.msra.mxu0 0.0
    %173 = vmatprep.subr.mxu0 0.0
    %174 = vmatpush1.msra.mxu0 0.0
    %175 = vmatprep.subr.mxu0 0.0
    %176 = vmatpush1.msra.mxu0 0.0
    %177 = vmatprep.subr.mxu0 0.0
    %178 = vmatpush1.msra.mxu0 0.0
    %179 = vmatprep.subr.mxu0 0.0
    %180 = vmatpush1.msra.mxu0 0.0
    %181 = vmatprep.subr.mxu0 0.0
    %182 = vmatpush1.msra.mxu0 0.0
    %183 = vmatprep.subr.mxu0 0.0
    %184 = vmatpush1.msra.mxu0 0.0
    %185 = vmatprep.subr.mxu0 0.0
    %186 = vmatpush1.msra.mxu0 0.0
    %187 = vmatprep.subr.mxu0 0.0
    %188 = vmatpush1.msra.mxu0 0.0
    %189 = vmatprep.subr.mxu0 0.0
    %190 = vmatpush1.msra.mxu0 0.0
    %191 = vmatprep.mubr.f32.mxu0 0.0
    %192 = vmatmul.mubr.f32.gmra.mrb[0].mxu0 %v125
    %v193 = vpop.f32.mrb[0].mxu0
    %v194 = vadd.f32 %v122, %v193
    %v195 = vpop.f32.mrb[0].mxu0
    %196 = vdwg.mxu0
    %vm197 = vcmask 31744
    %198 = vst.msk [vmem:[%s5] sm:$0xff] %vm197, %v194
    // Predicated region
    $region26: #{tpu_custom_call.1} parent=1 // pred_check
      _
    $region27: #{tpu_custom_call.1} parent=1 // pred_check_branch
      %200 = sbr.rel (0) target = $region29
    $region28: #{tpu_custom_call.1} parent=1 // pred_region
      _
    $region29: #{tpu_custom_call.1} parent=1 // pred_fallthru
      _
    // Predicated region
    $region30: #{tpu_custom_call.1} parent=1 // pred_check
      _
    $region31: #{tpu_custom_call.1} parent=1 // pred_check_branch
      %202 = sbr.rel (0) target = $region33
    $region32: #{tpu_custom_call.1} parent=1 // pred_region
      _
    $region33: #{tpu_custom_call.1} parent=1 // pred_fallthru
      _
    %203 = vsyncpa [#allocation3], 1

</llo_original>
